<compile_context>
chip_gen: v5e
topology: v5e:2x2
jax: 0.10.0
libtpu: 0.0.40
codegen_flags: <defaults>
</compile_context>

<pallas_src>
import functools

import jax
import jax.numpy as jnp
import numpy as np
from jax.experimental import pallas as pl
from jax.experimental.pallas import tpu as pltpu


def _linear_relu_kernel(x_ref, w_ref, b_ref, o_ref, acc_ref):
    """Grid = (M/tm, N/tn, K/tk); last axis is the reduction (sequential)."""
    k = pl.program_id(2)

    @pl.when(k == 0)
    def _():
        acc_ref[...] = jnp.zeros_like(acc_ref)

    # First ReLU fused into the operand load (no separate pass over x).
    x = jnp.maximum(x_ref[...], 0).astype(jnp.float32)
    acc_ref[...] += jnp.dot(x, w_ref[...].astype(jnp.float32),
                            preferred_element_type=jnp.float32)

    @pl.when(k == pl.num_programs(2) - 1)
    def _():
        # Bias add + second ReLU fused into the epilogue, lane-dense store.
        out = acc_ref[...] + b_ref[...].astype(jnp.float32)
        o_ref[...] = jnp.maximum(out, 0).astype(o_ref.dtype)


def _round_up(v, m):
    return ((v + m - 1) // m) * m


@functools.partial(jax.jit, static_argnames=("tm", "tn", "tk"))
def linear_relu_forward(x, weight, bias, *, tm=None, tn=None, tk=None):
    """y = relu(linear(relu(x)))  with PyTorch-shaped weight (out, in), bias (out,).

    Accepts x of shape (..., inSize); returns (..., outSize).
    """
    orig_lead = x.shape[:-1]
    K = x.shape[-1]
    N = weight.shape[0]
    M = 1
    for d in orig_lead:
        M *= int(d)
    x2 = x.reshape(M, K)
    w = jnp.transpose(weight)  # (K, N) so the kernel does plain (tm,tk)@(tk,tn)

    # Tile sizes: sublane-aligned M tile, lane-aligned K/N tiles; clamp so tiny
    # problems become a single full-array block.
    tm = tm if tm is not None else min(256, _round_up(M, 8))
    tk = tk if tk is not None else min(512, _round_up(K, 128))
    tn = tn if tn is not None else min(256, _round_up(N, 128))

    Mp, Kp, Np = _round_up(M, tm), _round_up(K, tk), _round_up(N, tn)

    x_p = jnp.pad(x2, ((0, Mp - M), (0, Kp - K)))
    w_p = jnp.pad(w, ((0, Kp - K), (0, Np - N)))
    b_p = jnp.pad(bias, (0, Np - N)).reshape(1, Np)

    grid = (Mp // tm, Np // tn, Kp // tk)

    out = pl.pallas_call(
        _linear_relu_kernel,
        out_shape=jax.ShapeDtypeStruct((Mp, Np), x.dtype),
        grid_spec=pltpu.PrefetchScalarGridSpec(
            num_scalar_prefetch=0,
            grid=grid,
            in_specs=[
                pl.BlockSpec((tm, tk), lambda i, j, k: (i, k)),   # x tile
                pl.BlockSpec((tk, tn), lambda i, j, k: (k, j)),   # w tile
                pl.BlockSpec((1, tn), lambda i, j, k: (0, j)),    # bias tile
            ],
            out_specs=pl.BlockSpec((tm, tn), lambda i, j, k: (i, j)),
            scratch_shapes=[pltpu.VMEM((tm, tn), jnp.float32)],   # f32 accumulator
        ),
        compiler_params=pltpu.CompilerParams(
            dimension_semantics=("parallel", "parallel", "arbitrary"),
        ),
    )(x_p, w_p, b_p)

    return out[:M, :N].reshape(*orig_lead, N)


def _reference(x, weight, bias):
    h = jnp.maximum(x, 0.0)
    y = jnp.einsum("...k,nk->...n", h, weight) + bias
    return jnp.maximum(y, 0.0)


def _make_params(key, in_size, out_size, dtype=jnp.float32):
    bound = 1.0 / np.sqrt(in_size)
    kw, kb = jax.random.split(key)
    weight = jax.random.uniform(kw, (out_size, in_size), dtype, -bound, bound)
    bias = jax.random.uniform(kb, (out_size,), dtype, -bound, bound)
    return weight, bias


if __name__ == "__main__":
    key = jax.random.PRNGKey(0)

    # Small shape consistent with the module: batch=2, inSize=16, outSize=32.
    B, IN, OUT = 2, 16, 32
    key, kx, kp = jax.random.split(key, 3)
    x = jax.random.normal(kx, (B, IN), jnp.float32)
    weight, bias = _make_params(kp, IN, OUT)

    out = jax.block_until_ready(linear_relu_forward(x, weight, bias))
    assert out.shape == (B, OUT), out.shape
    ref = jax.block_until_ready(_reference(x, weight, bias))
    np.testing.assert_allclose(np.asarray(out), np.asarray(ref),
                               rtol=1e-5, atol=1e-5)

    # Second check: leading-dims + non-tile-aligned sizes exercise padding/grid.
    key, kx2, kp2 = jax.random.split(key, 3)
    x2 = jax.random.normal(kx2, (3, 5, 100), jnp.float32)   # (..., inSize=100)
    w2, b2 = _make_params(kp2, 100, 200)
    out2 = jax.block_until_ready(linear_relu_forward(x2, w2, b2))
    assert out2.shape == (3, 5, 200), out2.shape
    ref2 = jax.block_until_ready(_reference(x2, w2, b2))
    np.testing.assert_allclose(np.asarray(out2), np.asarray(ref2),
                               rtol=1e-5, atol=1e-5)

    print("KERNEL_OK")
</pallas_src>

<mosaic_0001>
module attributes {stable_mosaic.version = 11 : i64} {
  func.func @_linear_relu_kernel(%arg0: i32, %arg1: i32, %arg2: i32, %arg3: memref<8x128xf32, #tpu.memory_space<vmem>>, %arg4: memref<128x128xf32, #tpu.memory_space<vmem>>, %arg5: memref<1x128xf32, #tpu.memory_space<vmem>>, %arg6: memref<8x128xf32, #tpu.memory_space<vmem>>, %arg7: memref<8x128xf32, #tpu.memory_space<vmem>>) attributes {dimension_semantics = [#tpu.dimension_semantics<parallel>, #tpu.dimension_semantics<parallel>, #tpu.dimension_semantics<arbitrary>], iteration_bounds = array<i64: 1, 1, 1>, scalar_prefetch = 0 : i64, scratch_operands = 1 : i64, tpu.core_type = #tpu.core_type<tc>, window_params = [{transform_indices = @transform_0, window_bounds = array<i64: 8, 128>}, {transform_indices = @transform_1, window_bounds = array<i64: 128, 128>}, {transform_indices = @transform_2, window_bounds = array<i64: 1, 128>}, {transform_indices = @transform_3, window_bounds = array<i64: 8, 128>}]} {
    %c0_i32 = arith.constant 0 : i32
    %0 = arith.cmpi eq, %arg2, %c0_i32 : i32
    %1 = arith.extui %0 : i1 to i32
    %c0_i32_0 = arith.constant 0 : i32
    %2 = arith.cmpi ne, %1, %c0_i32_0 : i32
    scf.if %2 {
      %cst_11 = arith.constant 0.000000e+00 : f32
      %14 = vector.broadcast %cst_11 : f32 to vector<8x128xf32>
      %c0_12 = arith.constant 0 : index
      %c0_13 = arith.constant 0 : index
      %15 = vector.load %arg7[%c0_12, %c0_13] : memref<8x128xf32, #tpu.memory_space<vmem>>, vector<8x128xf32>
      tpu.vector_store %arg7[%c0_12, %c0_13], %14 {strides = array<i32>} : memref<8x128xf32, #tpu.memory_space<vmem>>, vector<8x128xf32>,
    } else {
    }
    %c0 = arith.constant 0 : index
    %c0_1 = arith.constant 0 : index
    %3 = vector.load %arg3[%c0, %c0_1] : memref<8x128xf32, #tpu.memory_space<vmem>>, vector<8x128xf32>
    %cst = arith.constant 0.000000e+00 : f32
    %4 = vector.broadcast %cst : f32 to vector<8x128xf32>
    %5 = arith.maximumf %3, %4 : vector<8x128xf32>
    %c0_2 = arith.constant 0 : index
    %c0_3 = arith.constant 0 : index
    %6 = vector.load %arg7[%c0_2, %c0_3] : memref<8x128xf32, #tpu.memory_space<vmem>>, vector<8x128xf32>
    %c0_4 = arith.constant 0 : index
    %c0_5 = arith.constant 0 : index
    %7 = vector.load %arg4[%c0_4, %c0_5] : memref<128x128xf32, #tpu.memory_space<vmem>>, vector<128x128xf32>
    %cst_6 = arith.constant dense<0.000000e+00> : vector<8x128xf32>
    %8 = tpu.matmul %5, %7, %cst_6 {dimension_numbers = #tpu.dot_dimension_numbers<[1], [0], [0], [1], [0, 0, 1, 1], [], []>} : vector<8x128xf32>, vector<128x128xf32>, vector<8x128xf32> -> vector<8x128xf32>
    %9 = arith.addf %6, %8 : vector<8x128xf32>
    %c0_7 = arith.constant 0 : index
    %c0_8 = arith.constant 0 : index
    %10 = vector.load %arg7[%c0_7, %c0_8] : memref<8x128xf32, #tpu.memory_space<vmem>>, vector<8x128xf32>
    tpu.vector_store %arg7[%c0_7, %c0_8], %9 {strides = array<i32>} : memref<8x128xf32, #tpu.memory_space<vmem>>, vector<8x128xf32>,
    %c0_i32_9 = arith.constant 0 : i32
    %11 = arith.cmpi eq, %arg2, %c0_i32_9 : i32
    %12 = arith.extui %11 : i1 to i32
    %c0_i32_10 = arith.constant 0 : i32
    %13 = arith.cmpi ne, %12, %c0_i32_10 : i32
    scf.if %13 {
      %c0_11 = arith.constant 0 : index
      %c0_12 = arith.constant 0 : index
      %14 = vector.load %arg7[%c0_11, %c0_12] : memref<8x128xf32, #tpu.memory_space<vmem>>, vector<8x128xf32>
      %c0_13 = arith.constant 0 : index
      %c0_14 = arith.constant 0 : index
      %15 = vector.load %arg5[%c0_13, %c0_14] : memref<1x128xf32, #tpu.memory_space<vmem>>, vector<1x128xf32>
      %16 = vector.broadcast %15 : vector<1x128xf32> to vector<8x128xf32>
      %17 = arith.addf %14, %16 : vector<8x128xf32>
      %cst_15 = arith.constant 0.000000e+00 : f32
      %18 = vector.broadcast %cst_15 : f32 to vector<8x128xf32>
      %19 = arith.maximumf %17, %18 : vector<8x128xf32>
      %c0_16 = arith.constant 0 : index
      %c0_17 = arith.constant 0 : index
      %20 = vector.load %arg6[%c0_16, %c0_17] : memref<8x128xf32, #tpu.memory_space<vmem>>, vector<8x128xf32>
      tpu.vector_store %arg6[%c0_16, %c0_17], %19 {strides = array<i32>} : memref<8x128xf32, #tpu.memory_space<vmem>>, vector<8x128xf32>,
    } else {
    }
    return
  }
  func.func @transform_0(%arg0: i32, %arg1: i32, %arg2: i32) -> (i32, i32) {
    %c0_i32 = arith.constant 0 : i32
    return %arg0, %arg2 : i32, i32
  }
  func.func @transform_1(%arg0: i32, %arg1: i32, %arg2: i32) -> (i32, i32) {
    %c0_i32 = arith.constant 0 : i32
    return %arg2, %arg1 : i32, i32
  }
  func.func @transform_2(%arg0: i32, %arg1: i32, %arg2: i32) -> (i32, i32) {
    %c0_i32 = arith.constant 0 : i32
    %c0_i32_0 = arith.constant 0 : i32
    return %c0_i32, %arg1 : i32, i32
  }
  func.func @transform_3(%arg0: i32, %arg1: i32, %arg2: i32) -> (i32, i32) {
    %c0_i32 = arith.constant 0 : i32
    return %arg0, %arg1 : i32, i32
  }
}

</mosaic_0001>

<llo_original>
// kernel: linear_relu_forward.1
$region0: #{linear_relu_forward.1}
  #allocation0 [shape = 'u32[]', space=smem, size = 0x4, offset = 0x4, fixed_abs, tag = 'smem constant byte address 0x4 - core index']
  #allocation1 [shape = 'u32[72,128]{1,0:T(1,128)}', space=vmem, size = 0x9000, scoped, tag = 'internal scratch']
  #allocation2 [shape = 'f32[8,128]{1,0:T(8,128)}', space=vmem, size = 0x1000, scoped, tag = 'scratch operand']
  %s0 = inlined_call_operand.vmem [shape: f32[8,128], index: 0, kind: input, shape index: {}]
  %s1 = inlined_call_operand.vmem [shape: f32[128,128], index: 1, kind: input, shape index: {}]
  %s2 = inlined_call_operand.vmem [shape: f32[1,128], index: 2, kind: input, shape index: {}]
  %s3 = inlined_call_operand.vmem [shape: f32[8,128], index: 3, kind: output, shape index: {}]
  %s4 = sld [smem:[#allocation0]]
  $region30: #{linear_relu_forward.1} parent=0
    _
  %s6 = ssub.s32 1, %s4
  %s7 = scalar_select 0, %s6, %s4
  // Predicated region
  $region2: #{linear_relu_forward.1} parent=0 // pred_check
    _
  $region3: #{linear_relu_forward.1} parent=0 // pred_check_branch
    %9 = sbr.rel (0) target = $region5
  $region4: #{linear_relu_forward.1} parent=0 // pred_region
    _
  $region5: #{linear_relu_forward.1} parent=0 // pred_fallthru
    _
  // Predicated region
  $region6: #{linear_relu_forward.1} parent=0 // pred_check
    _
  $region7: #{linear_relu_forward.1} parent=0 // pred_check_branch
    %11 = sbr.rel (0) target = $region9
  $region8: #{linear_relu_forward.1} parent=0 // pred_region
    _
  $region9: #{linear_relu_forward.1} parent=0 // pred_fallthru
    _
  // Predicated region
  $region10: #{linear_relu_forward.1} parent=0 // pred_check
    _
  $region11: #{linear_relu_forward.1} parent=0 // pred_check_branch
    %13 = sbr.rel (0) target = $region13
  $region12: #{linear_relu_forward.1} parent=0 // pred_region
    _
  $region13: #{linear_relu_forward.1} parent=0 // pred_fallthru
    _
  %p14 = scmp.eq.s32.totalorder 0, 0
  // Predicated region
  $region14: #{linear_relu_forward.1} parent=0 // pred_check
    %p15 = pneg %p14
  $region15: #{linear_relu_forward.1} parent=0 // pred_check_branch
    %17 = sbr.rel (%p15) target = $region17
  $region16: #{linear_relu_forward.1} parent=0 // pred_region
    %18 = vst [vmem:[#allocation2] sm:$0xff] 0.0
  $region17: #{linear_relu_forward.1} parent=0 // pred_fallthru
    _
  %v19 = vld [vmem:[%s0] sm:$0xff]
  %v20 = vmax.f32 %v19, 0.0
  %v21 = vld [vmem:[#allocation2] sm:$0xff]
  %v22 = vld [vmem:[%s1] sm:$0xff]
  %v23 = vld [vmem:[%s1 + $0x8] sm:$0xff]
  %v24 = vld [vmem:[%s1 + $0x10] sm:$0xff]
  %v25 = vld [vmem:[%s1 + $0x18] sm:$0xff]
  %v26 = vld [vmem:[%s1 + $0x20] sm:$0xff]
  %v27 = vld [vmem:[%s1 + $0x28] sm:$0xff]
  %v28 = vld [vmem:[%s1 + $0x30] sm:$0xff]
  %v29 = vld [vmem:[%s1 + $0x38] sm:$0xff]
  %v30 = vld [vmem:[%s1 + $0x40] sm:$0xff]
  %v31 = vld [vmem:[%s1 + $0x48] sm:$0xff]
  %v32 = vld [vmem:[%s1 + $0x50] sm:$0xff]
  %v33 = vld [vmem:[%s1 + $0x58] sm:$0xff]
  %v34 = vld [vmem:[%s1 + $0x60] sm:$0xff]
  %v35 = vld [vmem:[%s1 + $0x68] sm:$0xff]
  %v36 = vld [vmem:[%s1 + $0x70] sm:$0xff]
  %v37 = vld [vmem:[%s1 + $0x78] sm:$0xff]
  %38 = vmatpush.msra.mxu0 %v37
  %39 = vmatpush.msra.mxu0 %v36
  %40 = vmatpush.msra.mxu0 %v35
  %41 = vmatpush.msra.mxu0 %v34
  %42 = vmatpush.msra.mxu0 %v33
  %43 = vmatpush.msra.mxu0 %v32
  %44 = vmatpush.msra.mxu0 %v31
  %45 = vmatpush.msra.mxu0 %v30
  %46 = vmatpush.msra.mxu0 %v29
  %47 = vmatpush.msra.mxu0 %v28
  %48 = vmatpush.msra.mxu0 %v27
  %49 = vmatpush.msra.mxu0 %v26
  %50 = vmatpush.msra.mxu0 %v25
  %51 = vmatpush.msra.mxu0 %v24
  %52 = vmatpush.msra.mxu0 %v23
  %53 = vmatpush.msra.mxu0 %v22
  %54 = vmatmul.f32.gmra.mxu0 %v20
  %v55 = vpop.f32.mrf.mxu0
  %v56 = vadd.f32 0.0, %v55
  %57 = vdwg.mxu0
  %v58 = vadd.f32 %v21, %v56
  %59 = vst [vmem:[#allocation2] sm:$0xff] %v58
  // Predicated region
  $region18: #{linear_relu_forward.1} parent=0 // pred_check
    %p60 = pneg %p14
  $region19: #{linear_relu_forward.1} parent=0 // pred_check_branch
    %62 = sbr.rel (%p60) target = $region21
  $region20: #{linear_relu_forward.1} parent=0 // pred_region
    %v63 = vld [vmem:[#allocation2] sm:$0xff]
    %v64 = vld [vmem:[%s2] sm:$0x1]
    %v66 = vperm.slane %v64, 0
    %v68 = vadd.f32 %v63, %v66
    %v69 = vmax.f32 %v68, 0.0
    %70 = vst [vmem:[%s3] sm:$0xff] %v69
  $region21: #{linear_relu_forward.1} parent=0 // pred_fallthru
    _
  // Predicated region
  $region22: #{linear_relu_forward.1} parent=0 // pred_check
    _
  $region23: #{linear_relu_forward.1} parent=0 // pred_check_branch
    %72 = sbr.rel (0) target = $region25
  $region24: #{linear_relu_forward.1} parent=0 // pred_region
    _
  $region25: #{linear_relu_forward.1} parent=0 // pred_fallthru
    _
  // Predicated region
  $region26: #{linear_relu_forward.1} parent=0 // pred_check
    _
  $region27: #{linear_relu_forward.1} parent=0 // pred_check_branch
    %74 = sbr.rel (0) target = $region29
  $region28: #{linear_relu_forward.1} parent=0 // pred_region
    _
  $region29: #{linear_relu_forward.1} parent=0 // pred_fallthru
    _

</llo_original>
